<compile_context>
chip_gen: v7x
topology: tpu7x:2x2x1
jax: 0.10.0
libtpu: 0.0.40
codegen_flags: <defaults>
</compile_context>

<pallas_src>
import jax
import jax.numpy as jnp
from jax.experimental import pallas as pl
from jax.experimental.pallas import tpu as pltpu


def _round_up(v, m):
    return (v + m - 1) // m * m


def _vmem_capacity_bytes():
    """Per-core VMEM capacity; conservative 64 MiB (v7x) if the query fails."""
    try:
        cap = getattr(pltpu.get_tpu_info(), "vmem_capacity_bytes", None)
        if cap:
            return int(cap)
    except Exception:
        pass
    return 64 * 1024 * 1024


# ---------------------------------------------------------------------------
# Path A: weights resident in VMEM.  Grid iterates token tiles only; weight /
# bias BlockSpecs use constant index_maps so their DMA happens exactly once.
# ---------------------------------------------------------------------------
def _mlp_resident_kernel(x_ref, w1_ref, b1_ref, w2_ref, b2_ref, o_ref):
    h = jnp.dot(x_ref[...], w1_ref[...], preferred_element_type=jnp.float32)
    h = jax.nn.gelu(h + b1_ref[...].astype(jnp.float32), approximate=True)
    out = jnp.dot(h.astype(w2_ref.dtype), w2_ref[...],
                  preferred_element_type=jnp.float32)
    o_ref[...] = (out + b2_ref[...].astype(jnp.float32)).astype(o_ref.dtype)


# ---------------------------------------------------------------------------
# Path B: mlp_dim (F) tiled on an "arbitrary" reduction axis; partial fc2
# results accumulate into a resident f32 buffer (o_ref itself when it is f32).
# ---------------------------------------------------------------------------
def _mlp_stream_kernel(x_ref, w1_ref, b1_ref, w2_ref, b2_ref, o_ref, *scratch):
    acc_ref = scratch[0] if scratch else o_ref
    k = pl.program_id(1)

    @pl.when(k == 0)
    def _init():
        acc_ref[...] = jnp.zeros_like(acc_ref)

    h = jnp.dot(x_ref[...], w1_ref[...], preferred_element_type=jnp.float32)
    h = jax.nn.gelu(h + b1_ref[...].astype(jnp.float32), approximate=True)
    acc_ref[...] += jnp.dot(h.astype(w2_ref.dtype), w2_ref[...],
                            preferred_element_type=jnp.float32)

    @pl.when(k == pl.num_programs(1) - 1)
    def _finalize():
        o_ref[...] = (acc_ref[...] + b2_ref[...].astype(jnp.float32)
                      ).astype(o_ref.dtype)


def mlp_forward(x, w1, b1, w2, b2, *, compute_dtype=jnp.bfloat16,
                tm_target=512, force_streaming=False):
    """Equivalent of Mlp.forward(x) in eval mode (dropout = identity).

    x : (..., H)   w1 : (H, F)   b1 : (F,)   w2 : (F, H)   b2 : (H,)
    """
    h_in, f_dim = w1.shape
    assert w2.shape == (f_dim, h_in) and x.shape[-1] == h_in
    assert b1.shape == (f_dim,) and b2.shape == (h_in,)

    cdt = jnp.dtype(compute_dtype) if compute_dtype is not None else jnp.dtype(x.dtype)
    out_dtype = x.dtype

    lead = x.shape[:-1]
    x2 = x.reshape(-1, h_in)
    n = x2.shape[0]

    # Lane-dense padding: hidden / mlp dims up to multiples of 128.  Padded
    # rows/cols are zero (and gelu(0) == 0), so results are unchanged.
    hp = _round_up(h_in, 128)
    fp = _round_up(f_dim, 128)

    # Token tile: target a large tile (amortizes weight streaming / per-step
    # overhead), but don't blow up tiny inputs, and keep >= 2 "parallel"
    # blocks for v7x megacore whenever possible.
    tm = max(8, min(int(tm_target), _round_up(n, 8)))
    if _round_up(n, tm) // tm < 2 and tm > 8:
        tm = max(8, _round_up(tm // 2, 8))
    n_tot = _round_up(n, tm)

    # Wrapper-side prep (cast + zero-pad); XLA fuses cast/pad into one pass.
    # TODO(synk): for very large N with resident weights, use a ragged last
    # token tile instead of jnp.pad to avoid the extra activation copy.
    x2 = jnp.pad(x2.astype(cdt), ((0, n_tot - n), (0, hp - h_in)))
    w1p = jnp.pad(w1.astype(cdt), ((0, hp - h_in), (0, fp - f_dim)))
    w2p = jnp.pad(w2.astype(cdt), ((0, fp - f_dim), (0, hp - h_in)))
    b1p = jnp.pad(b1.astype(jnp.float32), (0, fp - f_dim)).reshape(1, fp)
    b2p = jnp.pad(b2.astype(jnp.float32), (0, hp - h_in)).reshape(1, hp)

    c_sz = cdt.itemsize
    o_sz = jnp.dtype(out_dtype).itemsize
    vmem_cap = _vmem_capacity_bytes()
    vmem_limit = int(0.9 * vmem_cap)

    # VMEM budget for the resident path: weights/biases (assume Pallas double-
    # buffers them), double-buffered x / out tiles, and f32 fc1/gelu temps.
    resident_need = (2 * 2 * hp * fp * c_sz            # W1 + W2, 2 buffers each
                     + 2 * 2 * (fp + hp) * 4           # biases
                     + 2 * tm * hp * (c_sz + o_sz)     # x / out tiles
                     + 2 * tm * fp * 4)                # fc1 / gelu f32 temps
    use_resident = (not force_streaming) and resident_need <= int(0.7 * vmem_cap)

    n_blocks = n_tot // tm

    if use_resident:
        out = pl.pallas_call(
            _mlp_resident_kernel,
            out_shape=jax.ShapeDtypeStruct((n_tot, hp), out_dtype),
            grid_spec=pltpu.PrefetchScalarGridSpec(
                num_scalar_prefetch=0,
                grid=(n_blocks,),
                in_specs=[
                    pl.BlockSpec((tm, hp), lambda i: (i, 0)),   # x tile
                    pl.BlockSpec((hp, fp), lambda i: (0, 0)),   # W1 (resident)
                    pl.BlockSpec((1, fp),  lambda i: (0, 0)),   # b1 (resident)
                    pl.BlockSpec((fp, hp), lambda i: (0, 0)),   # W2 (resident)
                    pl.BlockSpec((1, hp),  lambda i: (0, 0)),   # b2 (resident)
                ],
                out_specs=pl.BlockSpec((tm, hp), lambda i: (i, 0)),
            ),
            compiler_params=pltpu.CompilerParams(
                dimension_semantics=("parallel",),
                vmem_limit_bytes=vmem_limit),
        )(x2, w1p, b1p, w2p, b2p)
    else:
        tf = 512 if fp % 512 == 0 else (256 if fp % 256 == 0 else 128)
        scratch = ([] if out_dtype == jnp.float32
                   else [pltpu.VMEM((tm, hp), jnp.float32)])
        out = pl.pallas_call(
            _mlp_stream_kernel,
            out_shape=jax.ShapeDtypeStruct((n_tot, hp), out_dtype),
            grid_spec=pltpu.PrefetchScalarGridSpec(
                num_scalar_prefetch=0,
                grid=(n_blocks, fp // tf),
                in_specs=[
                    pl.BlockSpec((tm, hp), lambda i, k: (i, 0)),   # x tile
                    pl.BlockSpec((hp, tf), lambda i, k: (0, k)),   # W1 tile
                    pl.BlockSpec((1, tf),  lambda i, k: (0, k)),   # b1 tile
                    pl.BlockSpec((tf, hp), lambda i, k: (k, 0)),   # W2 tile
                    pl.BlockSpec((1, hp),  lambda i, k: (0, 0)),   # b2
                ],
                out_specs=pl.BlockSpec((tm, hp), lambda i, k: (i, 0)),
                scratch_shapes=scratch,
            ),
            compiler_params=pltpu.CompilerParams(
                dimension_semantics=("parallel", "arbitrary"),
                vmem_limit_bytes=vmem_limit),
        )(x2, w1p, b1p, w2p, b2p)

    out = out[:n, :h_in]
    return out.reshape(*lead, h_in)


def _reference_mlp(x, w1, b1, w2, b2, compute_dtype=jnp.bfloat16):
    cdt = compute_dtype
    h = jnp.dot(x.astype(cdt), w1.astype(cdt),
                preferred_element_type=jnp.float32) + b1.astype(jnp.float32)
    h = jax.nn.gelu(h, approximate=True)
    out = jnp.dot(h.astype(cdt), w2.astype(cdt),
                  preferred_element_type=jnp.float32) + b2.astype(jnp.float32)
    return out.astype(x.dtype)


if __name__ == "__main__":
    key = jax.random.PRNGKey(0)
    kx, k1, k2, kb1, kb2 = jax.random.split(key, 5)

    # Small config consistent with the module: batch=2, seq=8,
    # hidden_size=32, mlp_dim=256.
    B, S, H, F = 2, 8, 32, 256

    x = jax.random.normal(kx, (B, S, H), dtype=jnp.float32)

    # Xavier-uniform weights, tiny-normal biases (matches _init_weights).
    lim1 = (6.0 / (H + F)) ** 0.5
    lim2 = (6.0 / (F + H)) ** 0.5
    w1 = jax.random.uniform(k1, (H, F), jnp.float32, -lim1, lim1)
    w2 = jax.random.uniform(k2, (F, H), jnp.float32, -lim2, lim2)
    b1 = 1e-6 * jax.random.normal(kb1, (F,), dtype=jnp.float32)
    b2 = 1e-6 * jax.random.normal(kb2, (H,), dtype=jnp.float32)

    ref = _reference_mlp(x, w1, b1, w2, b2)

    # Path A: weights-resident (default for these tiny weights).
    out_res = jax.block_until_ready(mlp_forward(x, w1, b1, w2, b2))
    assert out_res.shape == (B, S, H), out_res.shape
    assert jnp.allclose(out_res, ref, atol=3e-2, rtol=3e-2), (
        float(jnp.max(jnp.abs(out_res - ref))))

    # Path B: k-tiled streaming fallback (exercised explicitly for coverage).
    out_str = jax.block_until_ready(
        mlp_forward(x, w1, b1, w2, b2, force_streaming=True))
    assert out_str.shape == (B, S, H), out_str.shape
    assert jnp.allclose(out_str, ref, atol=3e-2, rtol=3e-2), (
        float(jnp.max(jnp.abs(out_str - ref))))

    print("KERNEL_OK")
</pallas_src>

<mosaic_0001>
module attributes {stable_mosaic.version = 11 : i64} {
  func.func @_mlp_resident_kernel(%arg0: i32, %arg1: memref<8x128xbf16, #tpu.memory_space<vmem>>, %arg2: memref<128x256xbf16, #tpu.memory_space<vmem>>, %arg3: memref<1x256xf32, #tpu.memory_space<vmem>>, %arg4: memref<256x128xbf16, #tpu.memory_space<vmem>>, %arg5: memref<1x128xf32, #tpu.memory_space<vmem>>, %arg6: memref<8x128xf32, #tpu.memory_space<vmem>>) attributes {dimension_semantics = [#tpu.dimension_semantics<parallel>], iteration_bounds = array<i64: 2>, scalar_prefetch = 0 : i64, scratch_operands = 0 : i64, tpu.core_type = #tpu.core_type<tc>, window_params = [{transform_indices = @transform_0, window_bounds = array<i64: 8, 128>}, {pipeline_mode = #tpu.pipeline_mode<synchronous>, transform_indices = @transform_1, window_bounds = array<i64: 128, 256>}, {pipeline_mode = #tpu.pipeline_mode<synchronous>, transform_indices = @transform_2, window_bounds = array<i64: 1, 256>}, {pipeline_mode = #tpu.pipeline_mode<synchronous>, transform_indices = @transform_3, window_bounds = array<i64: 256, 128>}, {pipeline_mode = #tpu.pipeline_mode<synchronous>, transform_indices = @transform_4, window_bounds = array<i64: 1, 128>}, {transform_indices = @transform_5, window_bounds = array<i64: 8, 128>}]} {
    %c0 = arith.constant 0 : index
    %c0_0 = arith.constant 0 : index
    %0 = vector.load %arg1[%c0, %c0_0] : memref<8x128xbf16, #tpu.memory_space<vmem>>, vector<8x128xbf16>
    %c0_1 = arith.constant 0 : index
    %c0_2 = arith.constant 0 : index
    %1 = vector.load %arg2[%c0_1, %c0_2] : memref<128x256xbf16, #tpu.memory_space<vmem>>, vector<128x256xbf16>
    %cst = arith.constant dense<0.000000e+00> : vector<8x256xf32>
    %2 = tpu.matmul %0, %1, %cst {dimension_numbers = #tpu.dot_dimension_numbers<[1], [0], [0], [1], [0, 0, 1, 1], [], []>} : vector<8x128xbf16>, vector<128x256xbf16>, vector<8x256xf32> -> vector<8x256xf32>
    %c0_3 = arith.constant 0 : index
    %c0_4 = arith.constant 0 : index
    %3 = vector.load %arg3[%c0_3, %c0_4] : memref<1x256xf32, #tpu.memory_space<vmem>>, vector<1x256xf32>
    %4 = vector.broadcast %3 : vector<1x256xf32> to vector<8x256xf32>
    %5 = arith.addf %2, %4 : vector<8x256xf32>
    %6 = arith.mulf %5, %5 : vector<8x256xf32>
    %7 = arith.mulf %5, %6 : vector<8x256xf32>
    %cst_5 = arith.constant 4.471500e-02 : f32
    %8 = vector.broadcast %cst_5 : f32 to vector<8x256xf32>
    %9 = arith.mulf %8, %7 : vector<8x256xf32>
    %10 = arith.addf %5, %9 : vector<8x256xf32>
    %cst_6 = arith.constant 0.797884583 : f32
    %11 = vector.broadcast %cst_6 : f32 to vector<8x256xf32>
    %12 = arith.mulf %11, %10 : vector<8x256xf32>
    %13 = math.tanh %12 : vector<8x256xf32>
    %cst_7 = arith.constant 1.000000e+00 : f32
    %14 = vector.broadcast %cst_7 : f32 to vector<8x256xf32>
    %15 = arith.addf %14, %13 : vector<8x256xf32>
    %cst_8 = arith.constant 5.000000e-01 : f32
    %16 = vector.broadcast %cst_8 : f32 to vector<8x256xf32>
    %17 = arith.mulf %16, %15 : vector<8x256xf32>
    %18 = arith.mulf %5, %17 : vector<8x256xf32>
    %19 = arith.truncf %18 : vector<8x256xf32> to vector<8x256xbf16>
    %c0_9 = arith.constant 0 : index
    %c0_10 = arith.constant 0 : index
    %20 = vector.load %arg4[%c0_9, %c0_10] : memref<256x128xbf16, #tpu.memory_space<vmem>>, vector<256x128xbf16>
    %cst_11 = arith.constant dense<0.000000e+00> : vector<8x128xf32>
    %21 = tpu.matmul %19, %20, %cst_11 {dimension_numbers = #tpu.dot_dimension_numbers<[1], [0], [0], [1], [0, 0, 1, 1], [], []>} : vector<8x256xbf16>, vector<256x128xbf16>, vector<8x128xf32> -> vector<8x128xf32>
    %c0_12 = arith.constant 0 : index
    %c0_13 = arith.constant 0 : index
    %22 = vector.load %arg5[%c0_12, %c0_13] : memref<1x128xf32, #tpu.memory_space<vmem>>, vector<1x128xf32>
    %23 = vector.broadcast %22 : vector<1x128xf32> to vector<8x128xf32>
    %24 = arith.addf %21, %23 : vector<8x128xf32>
    %c0_14 = arith.constant 0 : index
    %c0_15 = arith.constant 0 : index
    %25 = vector.load %arg6[%c0_14, %c0_15] : memref<8x128xf32, #tpu.memory_space<vmem>>, vector<8x128xf32>
    tpu.vector_store %arg6[%c0_14, %c0_15], %24 {strides = array<i32>} : memref<8x128xf32, #tpu.memory_space<vmem>>, vector<8x128xf32>,
    return
  }
  func.func @transform_0(%arg0: i32) -> (i32, i32) {
    %c0_i32 = arith.constant 0 : i32
    %c0_i32_0 = arith.constant 0 : i32
    return %arg0, %c0_i32 : i32, i32
  }
  func.func @transform_1(%arg0: i32) -> (i32, i32) {
    %c0_i32 = arith.constant 0 : i32
    %c0_i32_0 = arith.constant 0 : i32
    %c0_i32_1 = arith.constant 0 : i32
    return %c0_i32, %c0_i32_0 : i32, i32
  }
  func.func @transform_2(%arg0: i32) -> (i32, i32) {
    %c0_i32 = arith.constant 0 : i32
    %c0_i32_0 = arith.constant 0 : i32
    %c0_i32_1 = arith.constant 0 : i32
    return %c0_i32, %c0_i32_0 : i32, i32
  }
  func.func @transform_3(%arg0: i32) -> (i32, i32) {
    %c0_i32 = arith.constant 0 : i32
    %c0_i32_0 = arith.constant 0 : i32
    %c0_i32_1 = arith.constant 0 : i32
    return %c0_i32, %c0_i32_0 : i32, i32
  }
  func.func @transform_4(%arg0: i32) -> (i32, i32) {
    %c0_i32 = arith.constant 0 : i32
    %c0_i32_0 = arith.constant 0 : i32
    %c0_i32_1 = arith.constant 0 : i32
    return %c0_i32, %c0_i32_0 : i32, i32
  }
  func.func @transform_5(%arg0: i32) -> (i32, i32) {
    %c0_i32 = arith.constant 0 : i32
    %c0_i32_0 = arith.constant 0 : i32
    return %arg0, %c0_i32 : i32, i32
  }
}

</mosaic_0001>

<llo_original>
// kernel: tpu_custom_call.1
$region0: #{tpu_custom_call.1}
  #allocation0 [shape = 'u32[]', space=smem, size = 0x4, offset = 0x4, fixed_abs, tag = 'smem constant byte address 0x4 - core index']
  #allocation1 [shape = 'u32[144,128]{1,0:T(1,128)}', space=vmem, size = 0x12000, scoped, tag = 'internal scratch']
  %s0 = inlined_call_operand.hbm [shape: bf16[16,128], index: 0, kind: input, shape index: {}]
  %s1 = inlined_call_operand.hbm [shape: bf16[128,256], index: 1, kind: input, shape index: {}]
  %s2 = inlined_call_operand.vmem [shape: f32[1,256], index: 2, kind: input, shape index: {}]
  %s3 = inlined_call_operand.hbm [shape: bf16[256,128], index: 3, kind: input, shape index: {}]
  %s4 = inlined_call_operand.vmem [shape: f32[1,128], index: 4, kind: input, shape index: {}]
  %s5 = inlined_call_operand.hbm [shape: f32[16,128], index: 5, kind: output, shape index: {}]
  %s6 = sld [smem:[#allocation0]]
  $region65: #{tpu_custom_call.1} parent=0
    _
  %s8 = ssub.s32 1, %s6
  %s9 = scalar_select 0, %s8, %s6
  $region1: #{tpu_custom_call.1} parent=0
    #allocation2 [shape = 'u8[4096]{0}', space=vmem, size = 0x1000, scoped, tag = 'input window, operand 0']
    #allocation3 [shape = 's32[2]{0}', space=sflag, size = 0x8, scoped, tag = 'scoped memory for tpu_custom_call.1']
    #allocation4 [shape = 's32[2]{0}', space=sflag, size = 0x8, scoped, tag = 'scoped memory for tpu_custom_call.1']
    #allocation5 [shape = 'u8[65536]{0}', space=vmem, size = 0x10000, scoped, tag = 'input window, operand 1, single buffered']
    #allocation6 [shape = 's32[1]{0}', space=sflag, size = 0x4, scoped, tag = 'scoped memory for tpu_custom_call.1']
    #allocation7 [shape = 'u8[65536]{0}', space=vmem, size = 0x10000, scoped, tag = 'input window, operand 3, single buffered']
    #allocation8 [shape = 'u8[8192]{0}', space=vmem, size = 0x2000, scoped, tag = 'output window, operand 0']
    %10 = vsyncpa [#allocation3], 0
    %s11 = scalar_lea.sflag [#allocation3], 1
    %12 = vsyncpa %s11, 0
    %13 = vsyncpa [#allocation6], 0
    %14 = vsyncpa [#allocation4], 0
    %s15 = scalar_lea.sflag [#allocation4], 1
    %16 = vsyncpa %s15, 0
    loop: start=0, step=1, limit=4
    $region2: #{tpu_custom_call.1} parent=1 // loop_pre_header
      _
    $region3: #{tpu_custom_call.1} parent=1 // loop_header
      %s18 = sphi 0, %s22
      %p19 = scmp.ge.s32.totalorder %s18, 4
      %s28 = sphi 0, %s30
      %s31 = sphi 0, %s28
      %s32 = sphi 0, %s31
      %s48 = sphi 0, %s32
      %s52 = sphi 0, %s52
      %s54 = sphi 0, %s52
      %s55 = sphi 0, %s54
      %s69 = sphi 0, %s55
      %s73 = sphi 0, %s73
      %s75 = sphi 0, %s73
      %s76 = sphi 0, %s75
      %s90 = sphi 0, %s76
      %s94 = sphi 0, %s94
      %s96 = sphi 0, %s94
      %s97 = sphi 0, %s96
      %s111 = sphi 0, %s97
      %s115 = sphi 0, %s115
      %s117 = sphi 0, %s115
      %s118 = sphi 0, %s117
      %s132 = sphi 0, %s118
      %s138 = sphi 0, %s140
      %s141 = sphi 0, %s138
      %s142 = sphi 0, %s141
      %s158 = sphi 0, %s142
    $region4: #{tpu_custom_call.1} parent=1 // loop_header_branch
      %21 = sbr.rel (%p19) target = $region8
    $region5: #{tpu_custom_call.1} parent=1 // loop_body
      %s23 = ssub.s32 %s18, 1
      %s24 = ssub.s32 %s18, 2
      %s25 = sadd.s32 %s18, 1
      %s26 = ssub.s32 %s18, %s25
      %p27 = scmp.eq.s32.totalorder %s26, 0
      %s29 = sadd.s32 %s28, 1
      %s30 = scalar_select %p27, %s28, %s29
      %p33 = pneg %p27
      %p34 = scmp.eq.s32.totalorder %s18, 1
      %p35 = por %p33, %p34
      %p36 = scmp.ne.s32.totalorder %s28, %s31
      %p37 = scmp.eq.s32.totalorder %s18, 0
      %p38 = por %p36, %p37
      %p39 = scmp.ne.s32.totalorder %s28, %s31
      %p40 = scmp.eq.s32.totalorder %s23, 1
      %p41 = por %p39, %p40
      %p42 = scmp.ne.s32.totalorder %s31, %s32
      %p43 = scmp.eq.s32.totalorder %s23, 0
      %p44 = por %p42, %p43
      %p45 = scmp.ne.s32.totalorder %s31, %s32
      %p46 = scmp.eq.s32.totalorder %s24, 1
      %p47 = por %p45, %p46
      %p49 = scmp.ne.s32.totalorder %s32, %s48
      %p50 = scmp.eq.s32.totalorder %s24, 0
      %p51 = por %p49, %p50
      %s53 = sadd.s32 %s52, 1
      %p56 = scmp.eq.s32.totalorder %s18, 1
      %p57 = scmp.ne.s32.totalorder %s52, %s54
      %p58 = scmp.eq.s32.totalorder %s18, 0
      %p59 = por %p57, %p58
      %p60 = scmp.ne.s32.totalorder %s52, %s54
      %p61 = scmp.eq.s32.totalorder %s23, 1
      %p62 = por %p60, %p61
      %p63 = scmp.ne.s32.totalorder %s54, %s55
      %p64 = scmp.eq.s32.totalorder %s23, 0
      %p65 = por %p63, %p64
      %p66 = scmp.ne.s32.totalorder %s54, %s55
      %p67 = scmp.eq.s32.totalorder %s24, 1
      %p68 = por %p66, %p67
      %p70 = scmp.ne.s32.totalorder %s55, %s69
      %p71 = scmp.eq.s32.totalorder %s24, 0
      %p72 = por %p70, %p71
      %s74 = sadd.s32 %s73, 1
      %p77 = scmp.eq.s32.totalorder %s18, 1
      %p78 = scmp.ne.s32.totalorder %s73, %s75
      %p79 = scmp.eq.s32.totalorder %s18, 0
      %p80 = por %p78, %p79
      %p81 = scmp.ne.s32.totalorder %s73, %s75
      %p82 = scmp.eq.s32.totalorder %s23, 1
      %p83 = por %p81, %p82
      %p84 = scmp.ne.s32.totalorder %s75, %s76
      %p85 = scmp.eq.s32.totalorder %s23, 0
      %p86 = por %p84, %p85
      %p87 = scmp.ne.s32.totalorder %s75, %s76
      %p88 = scmp.eq.s32.totalorder %s24, 1
      %p89 = por %p87, %p88
      %p91 = scmp.ne.s32.totalorder %s76, %s90
      %p92 = scmp.eq.s32.totalorder %s24, 0
      %p93 = por %p91, %p92
      %s95 = sadd.s32 %s94, 1
      %p98 = scmp.eq.s32.totalorder %s18, 1
      %p99 = scmp.ne.s32.totalorder %s94, %s96
      %p100 = scmp.eq.s32.totalorder %s18, 0
      %p101 = por %p99, %p100
      %p102 = scmp.ne.s32.totalorder %s94, %s96
      %p103 = scmp.eq.s32.totalorder %s23, 1
      %p104 = por %p102, %p103
      %p105 = scmp.ne.s32.totalorder %s96, %s97
      %p106 = scmp.eq.s32.totalorder %s23, 0
      %p107 = por %p105, %p106
      %p108 = scmp.ne.s32.totalorder %s96, %s97
      %p109 = scmp.eq.s32.totalorder %s24, 1
      %p110 = por %p108, %p109
      %p112 = scmp.ne.s32.totalorder %s97, %s111
      %p113 = scmp.eq.s32.totalorder %s24, 0
      %p114 = por %p112, %p113
      %s116 = sadd.s32 %s115, 1
      %p119 = scmp.eq.s32.totalorder %s18, 1
      %p120 = scmp.ne.s32.totalorder %s115, %s117
      %p121 = scmp.eq.s32.totalorder %s18, 0
      %p122 = por %p120, %p121
      %p123 = scmp.ne.s32.totalorder %s115, %s117
      %p124 = scmp.eq.s32.totalorder %s23, 1
      %p125 = por %p123, %p124
      %p126 = scmp.ne.s32.totalorder %s117, %s118
      %p127 = scmp.eq.s32.totalorder %s23, 0
      %p128 = por %p126, %p127
      %p129 = scmp.ne.s32.totalorder %s117, %s118
      %p130 = scmp.eq.s32.totalorder %s24, 1
      %p131 = por %p129, %p130
      %p133 = scmp.ne.s32.totalorder %s118, %s132
      %p134 = scmp.eq.s32.totalorder %s24, 0
      %p135 = por %p133, %p134
      %s136 = ssub.s32 %s18, %s25
      %p137 = scmp.eq.s32.totalorder %s136, 0
      %s139 = sadd.s32 %s138, 1
      %s140 = scalar_select %p137, %s138, %s139
      %p143 = pneg %p137
      %p144 = scmp.eq.s32.totalorder %s18, 1
      %p145 = por %p143, %p144
      %p146 = scmp.ne.s32.totalorder %s138, %s141
      %p147 = scmp.eq.s32.totalorder %s18, 0
      %p148 = por %p146, %p147
      %p149 = scmp.ne.s32.totalorder %s138, %s141
      %p150 = scmp.eq.s32.totalorder %s23, 1
      %p151 = por %p149, %p150
      %p152 = scmp.ne.s32.totalorder %s141, %s142
      %p153 = scmp.eq.s32.totalorder %s23, 0
      %p154 = por %p152, %p153
      %p155 = scmp.ne.s32.totalorder %s141, %s142
      %p156 = scmp.eq.s32.totalorder %s24, 1
      %p157 = por %p155, %p156
      %p159 = scmp.ne.s32.totalorder %s142, %s158
      %p160 = scmp.eq.s32.totalorder %s24, 0
      %p161 = por %p159, %p160
      %p162 = scmp.le.s32.totalorder 1, %s18
      %p163 = scmp.lt.s32.totalorder %s18, 3
      %p164 = pnand %p162, %p163
      %p165 = pneg %p164
      // Predicated region
      $region9: #{tpu_custom_call.1} parent=5 // pred_check
        _
      $region10: #{tpu_custom_call.1} parent=5 // pred_check_branch
        %167 = sbr.rel (%p164) target = $region12
      $region11: #{tpu_custom_call.1} parent=5 // pred_region
        %s168 = ssub.s32 %s18, 1
        // Predicated region
        $region13: #{tpu_custom_call.1} parent=11 // pred_check
          %p169 = pneg %p65
        $region14: #{tpu_custom_call.1} parent=11 // pred_check_branch
          %171 = sbr.rel (%p169) target = $region16
        $region15: #{tpu_custom_call.1} parent=11 // pred_region
          %s173 = ssub.s32 2048, 2048
          %174 = vsyncadd [#allocation6], %s173
          %s175 = sshll.u32 [#allocation5], 4
          %s176 = int_to_ptr.vmem [resolvable:$true] %s175
          %181 = dma.hbm_to_vmem [thread:$0]  %s1, 2048, %s176, [#allocation6], 128, 128, 8
        $region16: #{tpu_custom_call.1} parent=11 // pred_fallthru
          _
        // Predicated region
        $region17: #{tpu_custom_call.1} parent=11 // pred_check
          %p182 = pneg %p86
        $region18: #{tpu_custom_call.1} parent=11 // pred_check_branch
          %184 = sbr.rel (%p182) target = $region20
        $region19: #{tpu_custom_call.1} parent=11 // pred_region
          _
        $region20: #{tpu_custom_call.1} parent=11 // pred_fallthru
          _
        // Predicated region
        $region21: #{tpu_custom_call.1} parent=11 // pred_check
          %p185 = pneg %p107
        $region22: #{tpu_custom_call.1} parent=11 // pred_check_branch
          %187 = sbr.rel (%p185) target = $region24
        $region23: #{tpu_custom_call.1} parent=11 // pred_region
          %s189 = ssub.s32 2048, 2048
          %190 = vsyncadd [#allocation6], %s189
          %s191 = sshll.u32 [#allocation7], 4
          %s192 = int_to_ptr.vmem [resolvable:$true] %s191
          %197 = dma.hbm_to_vmem [thread:$0]  %s3, 2048, %s192, [#allocation6], 64, 64, 4
        $region24: #{tpu_custom_call.1} parent=11 // pred_fallthru
          _
        // Predicated region
        $region25: #{tpu_custom_call.1} parent=11 // pred_check
          %p198 = pneg %p128
        $region26: #{tpu_custom_call.1} parent=11 // pred_check_branch
          %200 = sbr.rel (%p198) target = $region28
        $region27: #{tpu_custom_call.1} parent=11 // pred_region
          _
        $region28: #{tpu_custom_call.1} parent=11 // pred_fallthru
          _
      $region12: #{tpu_custom_call.1} parent=5 // pred_fallthru
        _
      %p201 = scmp.lt.s32.totalorder %s18, 2
      // Predicated region
      $region29: #{tpu_custom_call.1} parent=5 // pred_check
        %p202 = pneg %p201
      $region30: #{tpu_custom_call.1} parent=5 // pred_check_branch
        %204 = sbr.rel (%p202) target = $region32
      $region31: #{tpu_custom_call.1} parent=5 // pred_region
        // Predicated region
        $region33: #{tpu_custom_call.1} parent=31 // pred_check
          %p205 = pneg %p38
        $region34: #{tpu_custom_call.1} parent=31 // pred_check_branch
          %207 = sbr.rel (%p205) target = $region36
        $region35: #{tpu_custom_call.1} parent=31 // pred_region
          %s208 = sand.u32 %s28, 1
          %s209 = scalar_lea.sflag [#allocation3], %s208
          %s210 = sand.u32 %s28, 1
          %s211 = smul.addr %s210, 4
          %s212 = scalar_lea.vmem [#allocation2], %s211
          %s214 = ssub.s32 64, 64
          %215 = vsyncadd %s209, %s214
          %s216 = smul.addr %s18, 64
          %s217 = scalar_lea.hbm %s0, %s216
          %s219 = sshll.u32 %s212, 4
          %s220 = int_to_ptr.vmem [resolvable:$true] %s219
          %222 = dma.hbm_to_vmem [thread:$0]  %s217, 64, %s220, %s209
        $region36: #{tpu_custom_call.1} parent=31 // pred_fallthru
          _
      $region32: #{tpu_custom_call.1} parent=5 // pred_fallthru
        _
      %p223 = scmp.le.s32.totalorder 1, %s18
      %p224 = scmp.lt.s32.totalorder %s18, 3
      %p225 = pnand %p223, %p224
      %p226 = pneg %p225
      // Predicated region
      $region37: #{tpu_custom_call.1} parent=5 // pred_check
        _
      $region38: #{tpu_custom_call.1} parent=5 // pred_check_branch
        %228 = sbr.rel (%p225) target = $region40
      $region39: #{tpu_custom_call.1} parent=5 // pred_region
        %s229 = ssub.s32 %s18, 1
        %s230 = sand.u32 %s31, 1
        %s231 = scalar_lea.sflag [#allocation3], %s230
        %s232 = sand.u32 %s31, 1
        %s233 = smul.addr %s232, 4
        %s234 = scalar_lea.vmem [#allocation2], %s233
        // Predicated region
        $region41: #{tpu_custom_call.1} parent=39 // pred_check
          %p235 = pneg %p44
        $region42: #{tpu_custom_call.1} parent=39 // pred_check_branch
          %237 = sbr.rel (%p235) target = $region44
        $region43: #{tpu_custom_call.1} parent=39 // pred_region
          %238 = dma.done %s231, 64
        $region44: #{tpu_custom_call.1} parent=39 // pred_fallthru
          _
        // Predicated region
        $region45: #{tpu_custom_call.1} parent=39 // pred_check
          %p239 = pneg %p65
        $region46: #{tpu_custom_call.1} parent=39 // pred_check_branch
          %241 = sbr.rel (%p239) target = $region48
        $region47: #{tpu_custom_call.1} parent=39 // pred_region
          %242 = dma.done [#allocation6], 2048
        $region48: #{tpu_custom_call.1} parent=39 // pred_fallthru
          _
        // Predicated region
        $region49: #{tpu_custom_call.1} parent=39 // pred_check
          %p243 = pneg %p107
        $region50: #{tpu_custom_call.1} parent=39 // pred_check_branch
          %245 = sbr.rel (%p243) target = $region52
        $region51: #{tpu_custom_call.1} parent=39 // pred_region
          %246 = dma.done [#allocation6], 2048
        $region52: #{tpu_custom_call.1} parent=39 // pred_fallthru
          _
        %s247 = sand.u32 %s31, 1
        %s248 = scalar_lea.sflag [#allocation3], %s247
        %s249 = sand.u32 %s31, 1
        %s250 = smul.addr %s249, 4
        %s251 = scalar_lea.vmem [#allocation2], %s250
        %p252 = pneg %p44
        %p253 = pneg %p41
        %p254 = pneg %p65
        %p255 = pneg %p62
        %p256 = pneg %p86
        %p257 = pneg %p83
        %p258 = pneg %p107
        %p259 = pneg %p104
        %p260 = pneg %p128
        %p261 = pneg %p125
        %p262 = pneg %p154
        %p263 = pneg %p151
        %s264 = sand.u32 %s141, 1
        %s265 = scalar_lea.sflag [#allocation4], %s264
        %s266 = sand.u32 %s141, 1
        %s267 = smul.addr %s266, 8
        %s268 = scalar_lea.vmem [#allocation8], %s267
        %v270 = vld [vmem:[%s234] sm:$0xf]
        %v271 = vld [vmem:[#allocation5] sm:$0xff]
        %v272 = vld [vmem:[#allocation5 + $0x8] sm:$0xff]
        %v273 = vld [vmem:[#allocation5 + $0x10] sm:$0xff]
        %v274 = vld [vmem:[#allocation5 + $0x18] sm:$0xff]
        %v275 = vld [vmem:[#allocation5 + $0x20] sm:$0xff]
        %v276 = vld [vmem:[#allocation5 + $0x28] sm:$0xff]
        %v277 = vld [vmem:[#allocation5 + $0x30] sm:$0xff]
        %v278 = vld [vmem:[#allocation5 + $0x38] sm:$0xff]
        %v279 = vld [vmem:[#allocation5 + $0x40] sm:$0xff]
        %v280 = vld [vmem:[#allocation5 + $0x48] sm:$0xff]
        %v281 = vld [vmem:[#allocation5 + $0x50] sm:$0xff]
        %v282 = vld [vmem:[#allocation5 + $0x58] sm:$0xff]
        %v283 = vld [vmem:[#allocation5 + $0x60] sm:$0xff]
        %v284 = vld [vmem:[#allocation5 + $0x68] sm:$0xff]
        %v285 = vld [vmem:[#allocation5 + $0x70] sm:$0xff]
        %v286 = vld [vmem:[#allocation5 + $0x78] sm:$0xff]
        %v287 = vld [vmem:[%s2] sm:$0x3]
        %v289 = vlaneseq
        %v290 = vshrl.u32 %v289, 7
        %v291 = vsub.s32 0, %v290
        %v292 = vrot.slane %v287, %v291
        %v293 = vlaneseq
        %v294 = vshrl.u32 %v293, 7
        %v295 = vsub.s32 1, %v294
        %v296 = vrot.slane %v287, %v295
        %v315 = vunpack.c.l.b16 %v271
        %v316 = vunpack.c.h.b16 %v271
        %v317 = vunpack.c.l.b16 %v272
        %v318 = vunpack.c.h.b16 %v272
        %v319 = vunpack.c.l.b16 %v273
        %v320 = vunpack.c.h.b16 %v273
        %v321 = vunpack.c.l.b16 %v274
        %v322 = vunpack.c.h.b16 %v274
        %v323 = vunpack.c.l.b16 %v275
        %v324 = vunpack.c.h.b16 %v275
        %v325 = vunpack.c.l.b16 %v276
        %v326 = vunpack.c.h.b16 %v276
        %v327 = vunpack.c.l.b16 %v277
        %v328 = vunpack.c.h.b16 %v277
        %v329 = vunpack.c.l.b16 %v278
        %v330 = vunpack.c.h.b16 %v278
        %v331 = vunpack.c.l.b16 %v279
        %v332 = vunpack.c.h.b16 %v279
        %v333 = vunpack.c.l.b16 %v280
        %v334 = vunpack.c.h.b16 %v280
        %v335 = vunpack.c.l.b16 %v281
        %v336 = vunpack.c.h.b16 %v281
        %v337 = vunpack.c.l.b16 %v282
        %v338 = vunpack.c.h.b16 %v282
        %v339 = vunpack.c.l.b16 %v283
        %v340 = vunpack.c.h.b16 %v283
        %v341 = vunpack.c.l.b16 %v284
        %v342 = vunpack.c.h.b16 %v284
        %v343 = vunpack.c.l.b16 %v285
        %v344 = vunpack.c.h.b16 %v285
        %v345 = vunpack.c.l.b16 %v286
        %v346 = vunpack.c.h.b16 %v286
        %v347 = vpack.c.b16 %v317, %v315
        %v348 = vpack.c.b16 %v318, %v316
        %v349 = vpack.c.b16 %v321, %v319
        %v350 = vpack.c.b16 %v322, %v320
        %v351 = vpack.c.b16 %v325, %v323
        %v352 = vpack.c.b16 %v326, %v324
        %v353 = vpack.c.b16 %v329, %v327
        %v354 = vpack.c.b16 %v330, %v328
        %v355 = vpack.c.b16 %v333, %v331
        %v356 = vpack.c.b16 %v334, %v332
        %v357 = vpack.c.b16 %v337, %v335
        %v358 = vpack.c.b16 %v338, %v336
        %v359 = vpack.c.b16 %v341, %v339
        %v360 = vpack.c.b16 %v342, %v340
        %v361 = vpack.c.b16 %v345, %v343
        %v362 = vpack.c.b16 %v346, %v344
        %379 = vmatprep.subr.bf16.mxu0 %v348
        %380 = vmatpush1.bf16.msra.mxu0 %v347
        %381 = vmatprep.subr.bf16.mxu0 %v350
        %382 = vmatpush1.bf16.msra.mxu0 %v349
        %383 = vmatprep.subr.bf16.mxu0 %v352
        %384 = vmatpush1.bf16.msra.mxu0 %v351
        %385 = vmatprep.subr.bf16.mxu0 %v354
        %386 = vmatpush1.bf16.msra.mxu0 %v353
        %387 = vmatprep.subr.bf16.mxu0 %v356
        %388 = vmatpush1.bf16.msra.mxu0 %v355
        %389 = vmatprep.subr.bf16.mxu0 %v358
        %390 = vmatpush1.bf16.msra.mxu0 %v357
        %391 = vmatprep.subr.bf16.mxu0 %v360
        %392 = vmatpush1.bf16.msra.mxu0 %v359
        %393 = vmatprep.subr.bf16.mxu0 %v362
        %394 = vmatpush1.bf16.msra.mxu0 %v361
        %395 = vmatprep.subr.bf16.mxu0 0
        %396 = vmatpush1.bf16.msra.mxu0 0
        %397 = vmatprep.subr.bf16.mxu0 0
        %398 = vmatpush1.bf16.msra.mxu0 0
        %399 = vmatprep.subr.bf16.mxu0 0
        %400 = vmatpush1.bf16.msra.mxu0 0
        %401 = vmatprep.subr.bf16.mxu0 0
        %402 = vmatpush1.bf16.msra.mxu0 0
        %403 = vmatprep.subr.bf16.mxu0 0
        %404 = vmatpush1.bf16.msra.mxu0 0
        %405 = vmatprep.subr.bf16.mxu0 0
        %406 = vmatpush1.bf16.msra.mxu0 0
        %407 = vmatprep.subr.bf16.mxu0 0
        %408 = vmatpush1.bf16.msra.mxu0 0
        %409 = vmatprep.subr.bf16.mxu0 0
        %410 = vmatpush1.bf16.msra.mxu0 0
        %411 = vmatprep.mubr.bf16.mxu0 0
        %412 = vmatmul.mubr.bf16.gmra.mrb[0].mxu0 %v270
        %v413 = vpop.f32.mrb[0].mxu0
        %v414 = vadd.f32 %v292, %v413
        %v415 = vpop.f32.mrb[0].mxu0
        %v416 = vadd.f32 %v296, %v415
        %v417 = vpop.f32.mrb[0].mxu0
        %v418 = vpop.f32.mrb[0].mxu0
        %419 = vdwg.mxu0
        %v420 = vmul.f32 %v414, %v414
        %v421 = vmul.f32 %v416, %v416
        %v422 = vmul.f32 %v414, %v420
        %v423 = vmul.f32 %v416, %v421
        %v424 = vmul.f32 %v422, 0.044715
        %v425 = vmul.f32 %v423, 0.044715
        %v426 = vadd.f32 %v414, %v424
        %v427 = vadd.f32 %v416, %v425
        %v428 = vmul.f32 %v426, 0.7978846
        %v429 = vmul.f32 %v427, 0.7978846
        %v430 = vtanh.pop %v428
        %v431 = vtanh.pop %v429
        %v432 = vadd.f32 %v430, 1.0
        %v433 = vadd.f32 %v431, 1.0
        %v434 = vmul.f32 %v432, 0.5
        %v435 = vmul.f32 %v433, 0.5
        %v436 = vmul.f32 %v414, %v434
        %v437 = vmul.f32 %v416, %v435
        %v438 = vpack.c.bf16 %v436, %v436
        %v439 = vpack.c.bf16 %v437, %v437
        %v440 = vld [vmem:[#allocation7] sm:$0xf]
        %v441 = vld [vmem:[#allocation7 + $0x4] sm:$0xf]
        %v442 = vld [vmem:[#allocation7 + $0x8] sm:$0xf]
        %v443 = vld [vmem:[#allocation7 + $0xc] sm:$0xf]
        %v444 = vld [vmem:[#allocation7 + $0x10] sm:$0xf]
        %v445 = vld [vmem:[#allocation7 + $0x14] sm:$0xf]
        %v446 = vld [vmem:[#allocation7 + $0x18] sm:$0xf]
        %v447 = vld [vmem:[#allocation7 + $0x1c] sm:$0xf]
        %v448 = vld [vmem:[#allocation7 + $0x20] sm:$0xf]
        %v449 = vld [vmem:[#allocation7 + $0x24] sm:$0xf]
        %v450 = vld [vmem:[#allocation7 + $0x28] sm:$0xf]
        %v451 = vld [vmem:[#allocation7 + $0x2c] sm:$0xf]
        %v452 = vld [vmem:[#allocation7 + $0x30] sm:$0xf]
        %v453 = vld [vmem:[#allocation7 + $0x34] sm:$0xf]
        %v454 = vld [vmem:[#allocation7 + $0x38] sm:$0xf]
        %v455 = vld [vmem:[#allocation7 + $0x3c] sm:$0xf]
        %v456 = vld [vmem:[#allocation7 + $0x40] sm:$0xf]
        %v457 = vld [vmem:[#allocation7 + $0x44] sm:$0xf]
        %v458 = vld [vmem:[#allocation7 + $0x48] sm:$0xf]
        %v459 = vld [vmem:[#allocation7 + $0x4c] sm:$0xf]
        %v460 = vld [vmem:[#allocation7 + $0x50] sm:$0xf]
        %v461 = vld [vmem:[#allocation7 + $0x54] sm:$0xf]
        %v462 = vld [vmem:[#allocation7 + $0x58] sm:$0xf]
        %v463 = vld [vmem:[#allocation7 + $0x5c] sm:$0xf]
        %v464 = vld [vmem:[#allocation7 + $0x60] sm:$0xf]
        %v465 = vld [vmem:[#allocation7 + $0x64] sm:$0xf]
        %v466 = vld [vmem:[#allocation7 + $0x68] sm:$0xf]
        %v467 = vld [vmem:[#allocation7 + $0x6c] sm:$0xf]
        %v468 = vld [vmem:[#allocation7 + $0x70] sm:$0xf]
        %v469 = vld [vmem:[#allocation7 + $0x74] sm:$0xf]
        %v470 = vld [vmem:[#allocation7 + $0x78] sm:$0xf]
        %v471 = vld [vmem:[#allocation7 + $0x7c] sm:$0xf]
        %v472 = vld [vmem:[%s4] sm:$0x1]
        %v474 = vlaneseq
        %v475 = vshrl.u32 %v474, 7
        %v476 = vsub.s32 0, %v475
        %v477 = vrot.slane %v472, %v476
        %v511 = vunpack.c.l.b16 %v440
        %v512 = vunpack.c.l.b16 %v441
        %v513 = vunpack.c.l.b16 %v442
        %v514 = vunpack.c.l.b16 %v443
        %v515 = vunpack.c.l.b16 %v444
        %v516 = vunpack.c.l.b16 %v445
        %v517 = vunpack.c.l.b16 %v446
        %v518 = vunpack.c.l.b16 %v447
        %v519 = vunpack.c.l.b16 %v448
        %v520 = vunpack.c.l.b16 %v449
        %v521 = vunpack.c.l.b16 %v450
        %v522 = vunpack.c.l.b16 %v451
        %v523 = vunpack.c.l.b16 %v452
        %v524 = vunpack.c.l.b16 %v453
        %v525 = vunpack.c.l.b16 %v454
        %v526 = vunpack.c.l.b16 %v455
        %v527 = vunpack.c.l.b16 %v456
        %v528 = vunpack.c.l.b16 %v457
        %v529 = vunpack.c.l.b16 %v458
        %v530 = vunpack.c.l.b16 %v459
        %v531 = vunpack.c.l.b16 %v460
        %v532 = vunpack.c.l.b16 %v461
        %v533 = vunpack.c.l.b16 %v462
        %v534 = vunpack.c.l.b16 %v463
        %v535 = vunpack.c.l.b16 %v464
        %v536 = vunpack.c.l.b16 %v465
        %v537 = vunpack.c.l.b16 %v466
        %v538 = vunpack.c.l.b16 %v467
        %v539 = vunpack.c.l.b16 %v468
        %v540 = vunpack.c.l.b16 %v469
        %v541 = vunpack.c.l.b16 %v470
        %v542 = vunpack.c.l.b16 %v471
        %v543 = vpack.c.b16 %v512, %v511
        %v544 = vpack.c.b16 %v514, %v513
        %v545 = vpack.c.b16 %v516, %v515
        %v546 = vpack.c.b16 %v518, %v517
        %v547 = vpack.c.b16 %v520, %v519
        %v548 = vpack.c.b16 %v522, %v521
        %v549 = vpack.c.b16 %v524, %v523
        %v550 = vpack.c.b16 %v526, %v525
        %v551 = vpack.c.b16 %v528, %v527
        %v552 = vpack.c.b16 %v530, %v529
        %v553 = vpack.c.b16 %v532, %v531
        %v554 = vpack.c.b16 %v534, %v533
        %v555 = vpack.c.b16 %v536, %v535
        %v556 = vpack.c.b16 %v538, %v537
        %v557 = vpack.c.b16 %v540, %v539
        %v558 = vpack.c.b16 %v542, %v541
        %575 = vmatprep.subr.bf16.mxu0 0
        %576 = vmatpush1.bf16.msra.mxu0 %v543
        %577 = vmatprep.subr.bf16.mxu0 0
        %578 = vmatpush1.bf16.msra.mxu0 %v544
        %579 = vmatprep.subr.bf16.mxu0 0
        %580 = vmatpush1.bf16.msra.mxu0 %v545
        %581 = vmatprep.subr.bf16.mxu0 0
        %582 = vmatpush1.bf16.msra.mxu0 %v546
        %583 = vmatprep.subr.bf16.mxu0 0
        %584 = vmatpush1.bf16.msra.mxu0 %v547
        %585 = vmatprep.subr.bf16.mxu0 0
        %586 = vmatpush1.bf16.msra.mxu0 %v548
        %587 = vmatprep.subr.bf16.mxu0 0
        %588 = vmatpush1.bf16.msra.mxu0 %v549
        %589 = vmatprep.subr.bf16.mxu0 0
        %590 = vmatpush1.bf16.msra.mxu0 %v550
        %591 = vmatprep.subr.bf16.mxu0 0
        %592 = vmatpush1.bf16.msra.mxu0 %v551
        %593 = vmatprep.subr.bf16.mxu0 0
        %594 = vmatpush1.bf16.msra.mxu0 %v552
        %595 = vmatprep.subr.bf16.mxu0 0
        %596 = vmatpush1.bf16.msra.mxu0 %v553
        %597 = vmatprep.subr.bf16.mxu0 0
        %598 = vmatpush1.bf16.msra.mxu0 %v554
        %599 = vmatprep.subr.bf16.mxu0 0
        %600 = vmatpush1.bf16.msra.mxu0 %v555
        %601 = vmatprep.subr.bf16.mxu0 0
        %602 = vmatpush1.bf16.msra.mxu0 %v556
        %603 = vmatprep.subr.bf16.mxu0 0
        %604 = vmatpush1.bf16.msra.mxu0 %v557
        %605 = vmatprep.subr.bf16.mxu0 0
        %606 = vmatpush1.bf16.msra.mxu0 %v558
        %607 = vmatprep.mubr.bf16.mxu0 %v439
        %608 = vmatmul.mubr.bf16.gmra.mrb[0].mxu0 %v438
        %v609 = vpop.f32.mrb[0].mxu0
        %v610 = vadd.f32 %v477, %v609
        %v611 = vpop.f32.mrb[0].mxu0
        %v612 = vpop.f32.mrb[0].mxu0
        %v613 = vpop.f32.mrb[0].mxu0
        %614 = vdwg.mxu0
        %615 = vst [vmem:[%s268] sm:$0xff] %v610
        %s616 = sand.u32 %s141, 1
        %s617 = scalar_lea.sflag [#allocation4], %s616
        %s618 = sand.u32 %s141, 1
        %s619 = smul.addr %s618, 8
        %s620 = scalar_lea.vmem [#allocation8], %s619
        // Predicated region
        $region53: #{tpu_custom_call.1} parent=39 // pred_check
          %p621 = pneg %p151
        $region54: #{tpu_custom_call.1} parent=39 // pred_check_branch
          %623 = sbr.rel (%p621) target = $region56
        $region55: #{tpu_custom_call.1} parent=39 // pred_region
          %s625 = ssub.s32 128, 128
          %626 = vsyncadd %s617, %s625
          %s627 = smul.addr %s23, 128
          %s628 = scalar_lea.hbm %s5, %s627
          %s630 = sshll.u32 %s620, 4
          %s631 = int_to_ptr.vmem [resolvable:$true] %s630
          %633 = dma.vmem_to_hbm [thread:$0]  %s631, 128, %s628, %s617
        $region56: #{tpu_custom_call.1} parent=39 // pred_fallthru
          _
      $region40: #{tpu_custom_call.1} parent=5 // pred_fallthru
        _
      %p634 = scmp.le.s32.totalorder 2, %s18
      // Predicated region
      $region57: #{tpu_custom_call.1} parent=5 // pred_check
        %p635 = pneg %p634
      $region58: #{tpu_custom_call.1} parent=5 // pred_check_branch
        %637 = sbr.rel (%p635) target = $region60
      $region59: #{tpu_custom_call.1} parent=5 // pred_region
        %s638 = ssub.s32 %s18, 2
        // Predicated region
        $region61: #{tpu_custom_call.1} parent=59 // pred_check
          %p639 = pneg %p157
        $region62: #{tpu_custom_call.1} parent=59 // pred_check_branch
          %641 = sbr.rel (%p639) target = $region64
        $region63: #{tpu_custom_call.1} parent=59 // pred_region
          %s642 = sand.u32 %s142, 1
          %s643 = scalar_lea.sflag [#allocation4], %s642
          %s644 = sand.u32 %s142, 1
          %s645 = smul.addr %s644, 8
          %s646 = scalar_lea.vmem [#allocation8], %s645
          %647 = dma.done %s643, 128
        $region64: #{tpu_custom_call.1} parent=59 // pred_fallthru
          _
      $region60: #{tpu_custom_call.1} parent=5 // pred_fallthru
        _
    $region6: #{tpu_custom_call.1} parent=1 // loop_footer
      %s22 = sadd.s32 1, %s18
    $region7: #{tpu_custom_call.1} parent=1 // loop_footer_branch
      %17 = sbr.rel target = $region3
    $region8: #{tpu_custom_call.1} parent=1 // loop_exit
      _
    %648 = vsyncpa [#allocation3], 1
    %s649 = scalar_lea.sflag [#allocation3], 1
    %650 = vsyncpa %s649, 1
    %651 = vsyncpa [#allocation6], 1
    %652 = vsyncpa [#allocation4], 1
    %s653 = scalar_lea.sflag [#allocation4], 1
    %654 = vsyncpa %s653, 1

</llo_original>
